<compile_context>
chip_gen: v7x
topology: tpu7x:2x2x1
jax: 0.10.0
libtpu: 0.0.40
codegen_flags: <defaults>
</compile_context>

<pallas_src>
import jax
import jax.numpy as jnp
from jax.experimental import pallas as pl
from jax.experimental.pallas import tpu as pltpu

HIDDEN = 64
OUT = 1
_MIB = 1024 * 1024


def mlp1_kernel(x_ref, w1_ref, b1_ref, w2_ref, b2_ref, o_ref):
    # Layer 1 on the MXU: (TB, D) @ (D, 64), f32 accumulation.
    h = jnp.dot(x_ref[...], w1_ref[...], preferred_element_type=jnp.float32)
    # Bias + ReLU on the VPU.
    h = jnp.maximum(h + b1_ref[...], 0.0)
    # Layer 2 (width 1), lane-dense: contract the 64-wide hidden axis of h against the
    # (1, 64) weight row (same "contract last dims" pattern as q @ k^T in flash
    # attention), so the batch dim lands on the LANE axis of the (1, TB) result.
    o_row = jax.lax.dot_general(
        w2_ref[...], h,
        dimension_numbers=(((1,), (1,)), ((), ())),
        preferred_element_type=jnp.float32,
    )
    o_ref[...] = (o_row + b2_ref[...]).astype(o_ref.dtype)


def _vmem_capacity_bytes() -> int:
    try:
        return int(pltpu.get_tpu_info().vmem_capacity_bytes)
    except Exception:
        return 64 * _MIB  # conservative: assume the smallest generation (v7x, per-TC)


def _pick_tb(batch: int, in_features: int, x_itemsize: int):
    """Pick the batch tile from a generation-aware VMEM budget."""
    vmem_cap = _vmem_capacity_bytes()
    scoped_cap = (vmem_cap * 3) // 4          # ~48 MiB on v7x, ~96 MiB on v5e/v6e
    two_tc_likely = vmem_cap <= 64 * _MIB     # v7x proxy: 64 MiB/TC and 2 TCs per chip

    # Pallas double-buffers every input by default, including the constant-index
    # (VMEM-resident) weights, so budget 2 copies of them.
    resident = 2 * (in_features * HIDDEN + 2 * HIDDEN + OUT) * 4
    stream_budget = max(scoped_cap - resident - 4 * _MIB, 2 * _MIB)

    # Target multi-MiB x tiles (well past the measured HBM-roofline knee), two
    # pipeline buffers deep; the (1, TB) output buffers are negligible.
    tile_target = min(stream_budget // 2, vmem_cap // 8)   # ~8 MiB (v7x) / ~16 MiB
    tb = tile_target // max(in_features * x_itemsize, 1)

    if tb >= batch:
        tb = batch                            # single tile, full-extent blocks
        if two_tc_likely and batch >= 256:
            # v7x: guarantee >= 2 grid steps so both TensorCores get work.
            tb = ((pl.cdiv(batch, 2) + 127) // 128) * 128
    else:
        # Streamed tiles: multiple of 128 keeps the x block sublane-aligned and the
        # lane-dense (1, TB) output block an exact multiple of the 128-lane vreg.
        tb = max(128, (tb // 128) * 128)
    return int(tb), vmem_cap, scoped_cap


def mlp1_forward(x, w1, b1, w2, b2, *, tb=None):
    B, D = x.shape
    assert w1.shape == (D, HIDDEN)
    x_itemsize = jnp.dtype(x.dtype).itemsize

    auto_tb, _, scoped_cap = _pick_tb(B, D, x_itemsize)
    tb = auto_tb if tb is None else int(tb)
    n_tiles = pl.cdiv(B, tb)

    # Lane-dense parameter layouts (rows), f32.
    w1f = w1.astype(jnp.float32)
    b1_row = jnp.asarray(b1, jnp.float32).reshape(1, HIDDEN)
    w2_row = jnp.asarray(w2, jnp.float32).reshape(1, HIDDEN)
    b2_row = jnp.asarray(b2, jnp.float32).reshape(1, OUT)

    # Exact double-buffered footprint + headroom, capped below physical VMEM.
    resident_bytes = 2 * (D * HIDDEN + 2 * HIDDEN + OUT) * 4
    stream_bytes = 2 * tb * D * x_itemsize + 2 * tb * x_itemsize
    vmem_limit = int(min(max(resident_bytes + stream_bytes + 4 * _MIB, 16 * _MIB),
                         scoped_cap))

    cost = pl.CostEstimate(
        flops=2 * B * D * HIDDEN + 2 * B * HIDDEN * OUT,
        transcendentals=0,
        bytes_accessed=(B * D + B * OUT) * x_itemsize
                       + (D * HIDDEN + 2 * HIDDEN + OUT) * 4,
    )

    out_row = pl.pallas_call(
        mlp1_kernel,
        out_shape=jax.ShapeDtypeStruct((1, B), x.dtype),
        grid=(n_tiles,),
        in_specs=[
            pl.BlockSpec((tb, D), lambda i: (i, 0)),        # x: streamed per batch tile
            pl.BlockSpec((D, HIDDEN), lambda i: (0, 0)),    # w1: VMEM-resident
            pl.BlockSpec((1, HIDDEN), lambda i: (0, 0)),    # b1: resident
            pl.BlockSpec((1, HIDDEN), lambda i: (0, 0)),    # w2 (row): resident
            pl.BlockSpec((1, OUT), lambda i: (0, 0)),       # b2: resident
        ],
        out_specs=pl.BlockSpec((1, tb), lambda i: (0, i)),  # lane-dense output row
        compiler_params=pltpu.CompilerParams(
            dimension_semantics=("parallel",),
            vmem_limit_bytes=vmem_limit,
        ),
        cost_estimate=cost,
    )(x, w1f, b1_row, w2_row, b2_row)

    # (1, B) row-major is the same linear layout as (B, 1): free reshape, no slice.
    return out_row.reshape(B, OUT)


def init_params(key, in_features):
    # Deterministic init mimicking PyTorch's default Linear init
    # (uniform(-1/sqrt(fan_in), 1/sqrt(fan_in))).
    k1, k2, k3, k4 = jax.random.split(key, 4)
    bound1 = 1.0 / jnp.sqrt(jnp.float32(in_features))
    bound2 = 1.0 / jnp.sqrt(jnp.float32(HIDDEN))
    w1 = jax.random.uniform(k1, (in_features, HIDDEN), jnp.float32, -bound1, bound1)
    b1 = jax.random.uniform(k2, (1, HIDDEN), jnp.float32, -bound1, bound1)
    w2 = jax.random.uniform(k3, (HIDDEN, OUT), jnp.float32, -bound2, bound2)
    b2 = jax.random.uniform(k4, (1, OUT), jnp.float32, -bound2, bound2)
    return w1, b1, w2, b2


if __name__ == "__main__":
    key = jax.random.PRNGKey(0)
    kx, kp = jax.random.split(key)

    batch, in_features = 8, 32
    x = jax.random.normal(kx, (batch, in_features), jnp.float32)
    w1, b1, w2, b2 = init_params(kp, in_features)

    out = jax.block_until_ready(mlp1_forward(x, w1, b1, w2, b2))
    ref = jnp.maximum(x @ w1 + b1, 0.0) @ w2 + b2
    assert out.shape == (batch, 1)
    assert jnp.allclose(out, ref, atol=1e-5, rtol=1e-5)

    # Batch not a multiple of 8 (single full-extent tile).
    x2 = jax.random.normal(jax.random.PRNGKey(1), (13, in_features), jnp.float32)
    out2 = jax.block_until_ready(mlp1_forward(x2, w1, b1, w2, b2))
    ref2 = jnp.maximum(x2 @ w1 + b1, 0.0) @ w2 + b2
    assert out2.shape == (13, 1)
    assert jnp.allclose(out2, ref2, atol=1e-5, rtol=1e-5)

    # Multi-tile + ragged (masked) last tile path, forced small tile.
    x3 = jax.random.normal(jax.random.PRNGKey(2), (300, in_features), jnp.float32)
    out3 = jax.block_until_ready(mlp1_forward(x3, w1, b1, w2, b2, tb=128))
    ref3 = jnp.maximum(x3 @ w1 + b1, 0.0) @ w2 + b2
    assert out3.shape == (300, 1)
    assert jnp.allclose(out3, ref3, atol=1e-5, rtol=1e-5)

    print("KERNEL_OK")
</pallas_src>

<mosaic_0001>
module attributes {stable_mosaic.version = 11 : i64} {
  func.func @mlp1_kernel(%arg0: i32, %arg1: memref<8x32xf32, #tpu.memory_space<vmem>>, %arg2: memref<32x64xf32, #tpu.memory_space<vmem>>, %arg3: memref<1x64xf32, #tpu.memory_space<vmem>>, %arg4: memref<1x64xf32, #tpu.memory_space<vmem>>, %arg5: memref<1x1xf32, #tpu.memory_space<vmem>>, %arg6: memref<1x8xf32, #tpu.memory_space<vmem>>) attributes {dimension_semantics = [#tpu.dimension_semantics<parallel>], iteration_bounds = array<i64: 1>, scalar_prefetch = 0 : i64, scratch_operands = 0 : i64, tpu.core_type = #tpu.core_type<tc>, window_params = [{transform_indices = @transform_0, window_bounds = array<i64: 8, 32>}, {pipeline_mode = #tpu.pipeline_mode<synchronous>, transform_indices = @transform_1, window_bounds = array<i64: 32, 64>}, {pipeline_mode = #tpu.pipeline_mode<synchronous>, transform_indices = @transform_2, window_bounds = array<i64: 1, 64>}, {pipeline_mode = #tpu.pipeline_mode<synchronous>, transform_indices = @transform_3, window_bounds = array<i64: 1, 64>}, {pipeline_mode = #tpu.pipeline_mode<synchronous>, transform_indices = @transform_4, window_bounds = array<i64: 1, 1>}, {transform_indices = @transform_5, window_bounds = array<i64: 1, 8>}]} {
    %c0 = arith.constant 0 : index
    %c0_0 = arith.constant 0 : index
    %0 = vector.load %arg1[%c0, %c0_0] : memref<8x32xf32, #tpu.memory_space<vmem>>, vector<8x32xf32>
    %c0_1 = arith.constant 0 : index
    %c0_2 = arith.constant 0 : index
    %1 = vector.load %arg2[%c0_1, %c0_2] : memref<32x64xf32, #tpu.memory_space<vmem>>, vector<32x64xf32>
    %cst = arith.constant dense<0.000000e+00> : vector<8x64xf32>
    %2 = tpu.matmul %0, %1, %cst {dimension_numbers = #tpu.dot_dimension_numbers<[1], [0], [0], [1], [0, 0, 1, 1], [], []>} : vector<8x32xf32>, vector<32x64xf32>, vector<8x64xf32> -> vector<8x64xf32>
    %c0_3 = arith.constant 0 : index
    %c0_4 = arith.constant 0 : index
    %3 = vector.load %arg3[%c0_3, %c0_4] : memref<1x64xf32, #tpu.memory_space<vmem>>, vector<1x64xf32>
    %4 = vector.broadcast %3 : vector<1x64xf32> to vector<8x64xf32>
    %5 = arith.addf %2, %4 : vector<8x64xf32>
    %cst_5 = arith.constant 0.000000e+00 : f32
    %6 = vector.broadcast %cst_5 : f32 to vector<8x64xf32>
    %7 = arith.maximumf %5, %6 : vector<8x64xf32>
    %c0_6 = arith.constant 0 : index
    %c0_7 = arith.constant 0 : index
    %8 = vector.load %arg4[%c0_6, %c0_7] : memref<1x64xf32, #tpu.memory_space<vmem>>, vector<1x64xf32>
    %cst_8 = arith.constant dense<0.000000e+00> : vector<1x8xf32>
    %9 = tpu.matmul %8, %7, %cst_8 {dimension_numbers = #tpu.dot_dimension_numbers<[1], [1], [0], [0], [0, 0, 1, 0], [], []>} : vector<1x64xf32>, vector<8x64xf32>, vector<1x8xf32> -> vector<1x8xf32>
    %c0_9 = arith.constant 0 : index
    %c0_10 = arith.constant 0 : index
    %10 = vector.load %arg5[%c0_9, %c0_10] : memref<1x1xf32, #tpu.memory_space<vmem>>, vector<1x1xf32>
    %11 = vector.broadcast %10 : vector<1x1xf32> to vector<1x8xf32>
    %12 = arith.addf %9, %11 : vector<1x8xf32>
    %c0_11 = arith.constant 0 : index
    %c0_12 = arith.constant 0 : index
    %13 = vector.load %arg6[%c0_11, %c0_12] : memref<1x8xf32, #tpu.memory_space<vmem>>, vector<1x8xf32>
    tpu.vector_store %arg6[%c0_11, %c0_12], %12 {strides = array<i32>} : memref<1x8xf32, #tpu.memory_space<vmem>>, vector<1x8xf32>,
    return
  }
  func.func @transform_0(%arg0: i32) -> (i32, i32) {
    %c0_i32 = arith.constant 0 : i32
    %c0_i32_0 = arith.constant 0 : i32
    return %arg0, %c0_i32 : i32, i32
  }
  func.func @transform_1(%arg0: i32) -> (i32, i32) {
    %c0_i32 = arith.constant 0 : i32
    %c0_i32_0 = arith.constant 0 : i32
    %c0_i32_1 = arith.constant 0 : i32
    return %c0_i32, %c0_i32_0 : i32, i32
  }
  func.func @transform_2(%arg0: i32) -> (i32, i32) {
    %c0_i32 = arith.constant 0 : i32
    %c0_i32_0 = arith.constant 0 : i32
    %c0_i32_1 = arith.constant 0 : i32
    return %c0_i32, %c0_i32_0 : i32, i32
  }
  func.func @transform_3(%arg0: i32) -> (i32, i32) {
    %c0_i32 = arith.constant 0 : i32
    %c0_i32_0 = arith.constant 0 : i32
    %c0_i32_1 = arith.constant 0 : i32
    return %c0_i32, %c0_i32_0 : i32, i32
  }
  func.func @transform_4(%arg0: i32) -> (i32, i32) {
    %c0_i32 = arith.constant 0 : i32
    %c0_i32_0 = arith.constant 0 : i32
    %c0_i32_1 = arith.constant 0 : i32
    return %c0_i32, %c0_i32_0 : i32, i32
  }
  func.func @transform_5(%arg0: i32) -> (i32, i32) {
    %c0_i32 = arith.constant 0 : i32
    %c0_i32_0 = arith.constant 0 : i32
    return %c0_i32, %arg0 : i32, i32
  }
}

</mosaic_0001>

<llo_original>
// kernel: tpu_custom_call.1
$region0: #{tpu_custom_call.1}
  #allocation0 [shape = 'u32[]', space=smem, size = 0x4, offset = 0x4, fixed_abs, tag = 'smem constant byte address 0x4 - core index']
  #allocation1 [shape = 'u32[144,128]{1,0:T(1,128)}', space=vmem, size = 0x12000, scoped, tag = 'internal scratch']
  #allocation2 [shape = 'f32[1,1]{1,0:T(1,128)S(1)}', space=vmem, size = 0x200, scoped, tag = 'scoped memory for tpu_custom_call.1']
  %s0 = inlined_call_operand.hbm [shape: f32[8,32], index: 0, kind: input, shape index: {}]
  %s1 = inlined_call_operand.hbm [shape: f32[32,64], index: 1, kind: input, shape index: {}]
  %s2 = inlined_call_operand.vmem [shape: f32[1,64], index: 2, kind: input, shape index: {}]
  %s3 = inlined_call_operand.vmem [shape: f32[1,64], index: 3, kind: input, shape index: {}]
  %s4 = inlined_call_operand.<no memory space> [shape: f32[1,1], index: 4, kind: input, shape index: {}]
  %s5 = inlined_call_operand.hbm [shape: f32[1,8], index: 5, kind: output, shape index: {}]
  %s6 = sld [smem:[#allocation0]]
  $region38: #{tpu_custom_call.1} parent=0
    _
  %s8 = ssub.s32 1, %s6
  %s9 = scalar_select 0, %s8, %s6
  %v10 = vstv %s4
  %11 = vst [vmem:[#allocation2] sm:$0x1] %v10
  $region1: #{tpu_custom_call.1} parent=0
    #allocation3 [shape = 'u8[4096]{0}', space=vmem, size = 0x1000, scoped, tag = 'input window, operand 0, single buffered']
    #allocation4 [shape = 's32[1]{0}', space=sflag, size = 0x4, scoped, tag = 'scoped memory for tpu_custom_call.1']
    #allocation5 [shape = 's32[1]{0}', space=sflag, size = 0x4, scoped, tag = 'scoped memory for tpu_custom_call.1']
    #allocation6 [shape = 'u8[16384]{0}', space=vmem, size = 0x4000, scoped, tag = 'input window, operand 1, single buffered']
    #allocation7 [shape = 's32[1]{0}', space=sflag, size = 0x4, scoped, tag = 'scoped memory for tpu_custom_call.1']
    #allocation8 [shape = 'u8[512]{0}', space=vmem, size = 0x400, scoped, tag = 'output window, operand 0, single buffered']
    %12 = vsyncpa [#allocation4], 0
    %13 = vsyncpa [#allocation7], 0
    %14 = vsyncpa [#allocation5], 0
    // Predicated region
    $region2: #{tpu_custom_call.1} parent=1 // pred_check
      _
    $region3: #{tpu_custom_call.1} parent=1 // pred_check_branch
      %16 = sbr.rel (0) target = $region5
    $region4: #{tpu_custom_call.1} parent=1 // pred_region
      %s18 = ssub.s32 128, 128
      %19 = vsyncadd [#allocation4], %s18
      %s21 = sshll.u32 [#allocation3], 4
      %s22 = int_to_ptr.vmem [resolvable:$true] %s21
      %24 = dma.hbm_to_vmem [thread:$0]  %s0, 128, %s22, [#allocation4]
    $region5: #{tpu_custom_call.1} parent=1 // pred_fallthru
      _
    // Predicated region
    $region6: #{tpu_custom_call.1} parent=1 // pred_check
      _
    $region7: #{tpu_custom_call.1} parent=1 // pred_check_branch
      %26 = sbr.rel (0) target = $region9
    $region8: #{tpu_custom_call.1} parent=1 // pred_region
      %s28 = ssub.s32 512, 512
      %29 = vsyncadd [#allocation7], %s28
      %s30 = sshll.u32 [#allocation6], 4
      %s31 = int_to_ptr.vmem [resolvable:$true] %s30
      %36 = dma.hbm_to_vmem [thread:$0]  %s1, 512, %s31, [#allocation7], 128, 128, 8
    $region9: #{tpu_custom_call.1} parent=1 // pred_fallthru
      _
    // Predicated region
    $region10: #{tpu_custom_call.1} parent=1 // pred_check
      _
    $region11: #{tpu_custom_call.1} parent=1 // pred_check_branch
      %38 = sbr.rel (0) target = $region13
    $region12: #{tpu_custom_call.1} parent=1 // pred_region
      _
    $region13: #{tpu_custom_call.1} parent=1 // pred_fallthru
      _
    // Predicated region
    $region14: #{tpu_custom_call.1} parent=1 // pred_check
      _
    $region15: #{tpu_custom_call.1} parent=1 // pred_check_branch
      %40 = sbr.rel (0) target = $region17
    $region16: #{tpu_custom_call.1} parent=1 // pred_region
      _
    $region17: #{tpu_custom_call.1} parent=1 // pred_fallthru
      _
    // Predicated region
    $region18: #{tpu_custom_call.1} parent=1 // pred_check
      _
    $region19: #{tpu_custom_call.1} parent=1 // pred_check_branch
      %42 = sbr.rel (0) target = $region21
    $region20: #{tpu_custom_call.1} parent=1 // pred_region
      _
    $region21: #{tpu_custom_call.1} parent=1 // pred_fallthru
      _
    // Predicated region
    $region22: #{tpu_custom_call.1} parent=1 // pred_check
      _
    $region23: #{tpu_custom_call.1} parent=1 // pred_check_branch
      %44 = sbr.rel (0) target = $region25
    $region24: #{tpu_custom_call.1} parent=1 // pred_region
      %45 = dma.done [#allocation4], 128
    $region25: #{tpu_custom_call.1} parent=1 // pred_fallthru
      _
    // Predicated region
    $region26: #{tpu_custom_call.1} parent=1 // pred_check
      _
    $region27: #{tpu_custom_call.1} parent=1 // pred_check_branch
      %47 = sbr.rel (0) target = $region29
    $region28: #{tpu_custom_call.1} parent=1 // pred_region
      %48 = dma.done [#allocation7], 512
    $region29: #{tpu_custom_call.1} parent=1 // pred_fallthru
      _
    %v49 = vld [vmem:[#allocation3] sm:$0xff]
    %v50 = vld [vmem:[#allocation6] sm:$0xff]
    %v51 = vld [vmem:[#allocation6 + $0x8] sm:$0xff]
    %v52 = vld [vmem:[#allocation6 + $0x10] sm:$0xff]
    %v53 = vld [vmem:[#allocation6 + $0x18] sm:$0xff]
    %v54 = vld [vmem:[%s2] sm:$0x1]
    %v56 = vlaneseq
    %v57 = vshrl.u32 %v56, 7
    %v58 = vsub.s32 0, %v57
    %v59 = vrot.slane %v54, %v58
    %vm61 = vcmask 261120
    %v63 = vsel %vm61, %v49, 0
    %65 = vmatprep.subr.mxu0 0.0
    %66 = vmatpush1.msra.mxu0 %v50
    %67 = vmatprep.subr.mxu0 0.0
    %68 = vmatpush1.msra.mxu0 %v51
    %69 = vmatprep.subr.mxu0 0.0
    %70 = vmatpush1.msra.mxu0 %v52
    %71 = vmatprep.subr.mxu0 0.0
    %72 = vmatpush1.msra.mxu0 %v53
    %73 = vmatprep.subr.mxu0 0.0
    %74 = vmatpush1.msra.mxu0 0.0
    %75 = vmatprep.subr.mxu0 0.0
    %76 = vmatpush1.msra.mxu0 0.0
    %77 = vmatprep.subr.mxu0 0.0
    %78 = vmatpush1.msra.mxu0 0.0
    %79 = vmatprep.subr.mxu0 0.0
    %80 = vmatpush1.msra.mxu0 0.0
    %81 = vmatprep.subr.mxu0 0.0
    %82 = vmatpush1.msra.mxu0 0.0
    %83 = vmatprep.subr.mxu0 0.0
    %84 = vmatpush1.msra.mxu0 0.0
    %85 = vmatprep.subr.mxu0 0.0
    %86 = vmatpush1.msra.mxu0 0.0
    %87 = vmatprep.subr.mxu0 0.0
    %88 = vmatpush1.msra.mxu0 0.0
    %89 = vmatprep.subr.mxu0 0.0
    %90 = vmatpush1.msra.mxu0 0.0
    %91 = vmatprep.subr.mxu0 0.0
    %92 = vmatpush1.msra.mxu0 0.0
    %93 = vmatprep.subr.mxu0 0.0
    %94 = vmatpush1.msra.mxu0 0.0
    %95 = vmatprep.subr.mxu0 0.0
    %96 = vmatpush1.msra.mxu0 0.0
    %97 = vmatprep.subr.mxu0 0.0
    %98 = vmatpush1.msra.mxu0 0.0
    %99 = vmatprep.subr.mxu0 0.0
    %100 = vmatpush1.msra.mxu0 0.0
    %101 = vmatprep.subr.mxu0 0.0
    %102 = vmatpush1.msra.mxu0 0.0
    %103 = vmatprep.subr.mxu0 0.0
    %104 = vmatpush1.msra.mxu0 0.0
    %105 = vmatprep.subr.mxu0 0.0
    %106 = vmatpush1.msra.mxu0 0.0
    %107 = vmatprep.subr.mxu0 0.0
    %108 = vmatpush1.msra.mxu0 0.0
    %109 = vmatprep.subr.mxu0 0.0
    %110 = vmatpush1.msra.mxu0 0.0
    %111 = vmatprep.subr.mxu0 0.0
    %112 = vmatpush1.msra.mxu0 0.0
    %113 = vmatprep.subr.mxu0 0.0
    %114 = vmatpush1.msra.mxu0 0.0
    %115 = vmatprep.subr.mxu0 0.0
    %116 = vmatpush1.msra.mxu0 0.0
    %117 = vmatprep.subr.mxu0 0.0
    %118 = vmatpush1.msra.mxu0 0.0
    %119 = vmatprep.subr.mxu0 0.0
    %120 = vmatpush1.msra.mxu0 0.0
    %121 = vmatprep.subr.mxu0 0.0
    %122 = vmatpush1.msra.mxu0 0.0
    %123 = vmatprep.subr.mxu0 0.0
    %124 = vmatpush1.msra.mxu0 0.0
    %125 = vmatprep.subr.mxu0 0.0
    %126 = vmatpush1.msra.mxu0 0.0
    %127 = vmatprep.subr.mxu0 0.0
    %128 = vmatpush1.msra.mxu0 0.0
    %129 = vmatprep.mubr.f32.mxu0 0.0
    %130 = vmatmul.mubr.f32.gmra.mrb[0].mxu0 %v63
    %v131 = vpop.f32.mrb[0].mxu0
    %v132 = vadd.f32 %v59, %v131
    %v133 = vpop.f32.mrb[0].mxu0
    %134 = vdwg.mxu0
    %v135 = vmax.f32 %v132, 0.0
    %v136 = vld [vmem:[%s3] sm:$0x1]
    %v137 = vld [vmem:[#allocation2] sm:$0x1]
    %139 = vset.pattern.permute.xlu0 0
    %140 = vperm.xlu0 %139, %v137
    %v141 = vpop.permute.xlu0 %140
    %v143 = vlaneseq
    %v144 = vshrl.u32 %v143, 7
    %v145 = vsub.s32 0, %v144
    %v146 = vrot.slane %v141, %v145
    %vm147 = vcmask 523264
    %v149 = vsel %vm147, %v136, 0
    %v152 = vsel %vm147, %v135, 0
    %154 = vmatprep.subr.mxu0 0.0
    %155 = vmatpush1.xpose.msra.mxu0 %v152
    %156 = vmatprep.subr.mxu0 0.0
    %157 = vmatpush1.xpose.msra.mxu0 0.0
    %158 = vmatprep.subr.mxu0 0.0
    %159 = vmatpush1.xpose.msra.mxu0 0.0
    %160 = vmatprep.subr.mxu0 0.0
    %161 = vmatpush1.xpose.msra.mxu0 0.0
    %162 = vmatprep.subr.mxu0 0.0
    %163 = vmatpush1.xpose.msra.mxu0 0.0
    %164 = vmatprep.subr.mxu0 0.0
    %165 = vmatpush1.xpose.msra.mxu0 0.0
    %166 = vmatprep.subr.mxu0 0.0
    %167 = vmatpush1.xpose.msra.mxu0 0.0
    %168 = vmatprep.subr.mxu0 0.0
    %169 = vmatpush1.xpose.msra.mxu0 0.0
    %170 = vmatprep.subr.mxu0 0.0
    %171 = vmatpush1.xpose.msra.mxu0 0.0
    %172 = vmatprep.subr.mxu0 0.0
    %173 = vmatpush1.xpose.msra.mxu0 0.0
    %174 = vmatprep.subr.mxu0 0.0
    %175 = vmatpush1.xpose.msra.mxu0 0.0
    %176 = vmatprep.subr.mxu0 0.0
    %177 = vmatpush1.xpose.msra.mxu0 0.0
    %178 = vmatprep.subr.mxu0 0.0
    %179 = vmatpush1.xpose.msra.mxu0 0.0
    %180 = vmatprep.subr.mxu0 0.0
    %181 = vmatpush1.xpose.msra.mxu0 0.0
    %182 = vmatprep.subr.mxu0 0.0
    %183 = vmatpush1.xpose.msra.mxu0 0.0
    %184 = vmatprep.subr.mxu0 0.0
    %185 = vmatpush1.xpose.msra.mxu0 0.0
    %186 = vmatprep.subr.mxu0 0.0
    %187 = vmatpush1.xpose.msra.mxu0 0.0
    %188 = vmatprep.subr.mxu0 0.0
    %189 = vmatpush1.xpose.msra.mxu0 0.0
    %190 = vmatprep.subr.mxu0 0.0
    %191 = vmatpush1.xpose.msra.mxu0 0.0
    %192 = vmatprep.subr.mxu0 0.0
    %193 = vmatpush1.xpose.msra.mxu0 0.0
    %194 = vmatprep.subr.mxu0 0.0
    %195 = vmatpush1.xpose.msra.mxu0 0.0
    %196 = vmatprep.subr.mxu0 0.0
    %197 = vmatpush1.xpose.msra.mxu0 0.0
    %198 = vmatprep.subr.mxu0 0.0
    %199 = vmatpush1.xpose.msra.mxu0 0.0
    %200 = vmatprep.subr.mxu0 0.0
    %201 = vmatpush1.xpose.msra.mxu0 0.0
    %202 = vmatprep.subr.mxu0 0.0
    %203 = vmatpush1.xpose.msra.mxu0 0.0
    %204 = vmatprep.subr.mxu0 0.0
    %205 = vmatpush1.xpose.msra.mxu0 0.0
    %206 = vmatprep.subr.mxu0 0.0
    %207 = vmatpush1.xpose.msra.mxu0 0.0
    %208 = vmatprep.subr.mxu0 0.0
    %209 = vmatpush1.xpose.msra.mxu0 0.0
    %210 = vmatprep.subr.mxu0 0.0
    %211 = vmatpush1.xpose.msra.mxu0 0.0
    %212 = vmatprep.subr.mxu0 0.0
    %213 = vmatpush1.xpose.msra.mxu0 0.0
    %214 = vmatprep.subr.mxu0 0.0
    %215 = vmatpush1.xpose.msra.mxu0 0.0
    %216 = vmatprep.subr.mxu0 0.0
    %217 = vmatpush1.xpose.msra.mxu0 0.0
    %218 = vmatprep.mubr.f32.mxu0 0.0
    %219 = vmatmul.mubr.f32.gmra.mrb[0].mxu0 %v149
    %v220 = vpop.f32.mrb[0].mxu0
    %v221 = vadd.f32 %v146, %v220
    %v222 = vpop.f32.mrb[0].mxu0
    %223 = vdwg.mxu0
    %vm224 = vcmask 57344
    %225 = vst.msk [vmem:[#allocation8] sm:$0x1] %vm224, %v221
    // Predicated region
    $region30: #{tpu_custom_call.1} parent=1 // pred_check
      _
    $region31: #{tpu_custom_call.1} parent=1 // pred_check_branch
      %227 = sbr.rel (0) target = $region33
    $region32: #{tpu_custom_call.1} parent=1 // pred_region
      %s229 = ssub.s32 16, 16
      %230 = vsyncadd [#allocation5], %s229
      %s232 = sshll.u32 [#allocation8], 4
      %s233 = int_to_ptr.vmem [resolvable:$true] %s232
      %235 = dma.vmem_to_hbm [thread:$0]  %s233, 16, %s5, [#allocation5]
    $region33: #{tpu_custom_call.1} parent=1 // pred_fallthru
      _
    // Predicated region
    $region34: #{tpu_custom_call.1} parent=1 // pred_check
      _
    $region35: #{tpu_custom_call.1} parent=1 // pred_check_branch
      %237 = sbr.rel (0) target = $region37
    $region36: #{tpu_custom_call.1} parent=1 // pred_region
      %238 = dma.done [#allocation5], 16
    $region37: #{tpu_custom_call.1} parent=1 // pred_fallthru
      _
    %239 = vsyncpa [#allocation4], 1
    %240 = vsyncpa [#allocation7], 1
    %241 = vsyncpa [#allocation5], 1

</llo_original>
